<compile_context>
chip_gen: v7x
topology: tpu7x:2x2x1
jax: 0.10.0
libtpu: 0.0.40
codegen_flags: <defaults>
</compile_context>

<pallas_src>
import functools

import jax
import jax.numpy as jnp
from jax.experimental import pallas as pl
from jax.experimental.pallas import tpu as pltpu

BN_EPS = 1e-5
LANE = 128
SUBLANE = 8


def _round_up(n, m):
    return ((n + m - 1) // m) * m


def _layer_kernel(x_ref, w0_ref, g0_ref, b0_ref, w_ref, g_ref, b_ref,
                  o_ref, h_ref, *, b_real):
    """One grid step == one (Linear -> BN(train) -> ReLU) block.

    The activation stays resident in the f32 VMEM scratch `h_ref` across grid steps while
    Pallas streams (double-buffers) the per-layer bf16 weight slab behind the compute.
    """
    l = pl.program_id(0)
    n_l = pl.num_programs(0)
    inv_b = 1.0 / b_real
    bp = h_ref.shape[0]
    # Mask for zero-padded batch rows so batch statistics only see the real rows.
    row_mask = jax.lax.broadcasted_iota(jnp.int32, (bp, 1), 0) < b_real

    def bn_relu(y, gamma, beta):
        # Training-mode BN; the Linear bias is dropped (cancels under mean subtraction).
        mean = jnp.sum(y, axis=0, keepdims=True) * inv_b           # padded rows of y are 0
        d = y - mean                                               # == y_torch - mean_torch
        dm = jnp.where(row_mask, d, 0.0)                           # centered, cancellation-safe
        var = jnp.sum(dm * dm, axis=0, keepdims=True) * inv_b      # (1, hp)
        scale = gamma * jax.lax.rsqrt(var + BN_EPS)                # (1, hp)
        h = jnp.maximum(d * scale + beta, 0.0)                     # one FMA + ReLU on (B, hp)
        return jnp.where(row_mask, h, 0.0)                         # keep padded rows exactly 0

    @pl.when(l == 0)
    def _():
        y = jnp.dot(x_ref[...], w0_ref[...], preferred_element_type=jnp.float32)
        h_ref[...] = bn_relu(y, g0_ref[...], b0_ref[...])

    @pl.when(l > 0)
    def _():
        y = jnp.dot(h_ref[...].astype(w_ref.dtype), w_ref[0],
                    preferred_element_type=jnp.float32)
        h_ref[...] = bn_relu(y, g_ref[0], b_ref[0])

    @pl.when(l == n_l - 1)
    def _():
        o_ref[...] = h_ref[...].astype(o_ref.dtype)


def pack_params(params, cells, hidden):
    """Transpose (out,in)->(in,out), cast weights to bf16, zero-pad features to 128 lanes,
    and stack the FC blocks.  Padded gamma/beta are zero so padded output columns stay 0."""
    cp = _round_up(cells, LANE)
    hp = _round_up(hidden, LANE)

    (w0, _b0, g0, be0), rest = params[0], params[1:]
    w0_t = jnp.zeros((cp, hp), jnp.bfloat16).at[:cells, :hidden].set(
        w0.T.astype(jnp.bfloat16))
    g0_p = jnp.zeros((1, hp), jnp.float32).at[:, :hidden].set(g0)
    b0_p = jnp.zeros((1, hp), jnp.float32).at[:, :hidden].set(be0)

    n = max(len(rest), 1)                 # dummy slab keeps layers == 0 compiling
    ws = jnp.zeros((n, hp, hp), jnp.bfloat16)
    gs = jnp.zeros((n, 1, hp), jnp.float32)
    bs = jnp.zeros((n, 1, hp), jnp.float32)
    for i, (w, _b, g, be) in enumerate(rest):
        ws = ws.at[i, :hidden, :hidden].set(w.T.astype(jnp.bfloat16))
        gs = gs.at[i, :, :hidden].set(g)
        bs = bs.at[i, :, :hidden].set(be)
    return w0_t, g0_p, b0_p, ws, gs, bs


@functools.partial(jax.jit, static_argnums=(2, 3))
def place_processor_forward(x, packed, hidden, layers):
    w0, g0, b0, ws, gs, bs = packed
    batch, cells = x.shape
    cp, hp = w0.shape
    bp = _round_up(max(batch, SUBLANE), SUBLANE)
    n_steps = 1 + layers

    # Zero-pad batch rows to a sublane multiple and features to the lane-padded width.
    xp = jnp.zeros((bp, cp), jnp.bfloat16).at[:batch, :cells].set(x.astype(jnp.bfloat16))

    resident2 = lambda l: (0, 0)                         # stays in VMEM across all steps
    fc_idx = lambda l: (jnp.maximum(l - 1, 0), 0, 0)     # streamed: layer l uses slab l-1

    flops = 2 * batch * (cells * hidden + layers * hidden * hidden) \
        + 10 * batch * hidden * (layers + 1)
    transcendentals = (layers + 1) * hidden
    bytes_accessed = (xp.size + w0.size + ws.size) * 2 \
        + (g0.size + b0.size + gs.size + bs.size + bp * hp) * 4

    # VMEM budget: x + W0 + 2 streamed FC slabs (bf16) + out block + h scratch (f32) + misc.
    est_vmem = (bp * cp + cp * hp + 2 * hp * hp) * 2 + 2 * bp * hp * 4 + 8 * hp * 4
    vmem_limit = int(min(max(4 * est_vmem, 8 * 2**20), 64 * 2**20))

    out_p = pl.pallas_call(
        functools.partial(_layer_kernel, b_real=batch),
        out_shape=jax.ShapeDtypeStruct((bp, hp), jnp.float32),
        grid=(n_steps,),
        in_specs=[
            pl.BlockSpec((bp, cp), resident2),       # x        (consumed at l == 0)
            pl.BlockSpec((cp, hp), resident2),       # W0^T     (bf16, resident)
            pl.BlockSpec((1, hp), resident2),        # gamma0
            pl.BlockSpec((1, hp), resident2),        # beta0
            pl.BlockSpec((1, hp, hp), fc_idx),       # FC weights, streamed per layer
            pl.BlockSpec((1, 1, hp), fc_idx),        # FC gamma
            pl.BlockSpec((1, 1, hp), fc_idx),        # FC beta
        ],
        out_specs=pl.BlockSpec((bp, hp), resident2),
        scratch_shapes=[pltpu.VMEM((bp, hp), jnp.float32)],   # resident activation
        compiler_params=pltpu.CompilerParams(
            dimension_semantics=("arbitrary",),
            vmem_limit_bytes=vmem_limit),
        cost_estimate=pl.CostEstimate(
            flops=int(flops),
            transcendentals=int(transcendentals),
            bytes_accessed=int(bytes_accessed)),
    )(xp, w0, g0, b0, ws, gs, bs)
    return out_p[:batch, :hidden]


def init_params(key, cells, hidden_size, layers):
    """Deterministic synthetic parameters matching PlaceProcessor.__init__ shapes."""
    params = []
    dims = [(cells, hidden_size)] + [(hidden_size, hidden_size)] * layers
    for (in_dim, out_dim) in dims:
        key, kw, kb, kg, kbeta = jax.random.split(key, 5)
        w = jax.random.normal(kw, (out_dim, in_dim), jnp.float32) * 0.1       # PyTorch (out, in)
        b = jax.random.normal(kb, (1, out_dim), jnp.float32) * 0.1
        gamma = 1.0 + 0.1 * jax.random.normal(kg, (1, out_dim), jnp.float32)
        beta = 0.1 * jax.random.normal(kbeta, (1, out_dim), jnp.float32)
        params.append((w, b, gamma, beta))
    return params


def _reference_forward(x, params):
    """Plain-JAX reference matching PyTorch semantics (Linear+bias, training-mode BN, ReLU).

    Matmul inputs are rounded to bf16 to mirror the kernel's MXU precision (f32 accumulate);
    the bias is kept (it cancels exactly under the batch-mean subtraction)."""
    h = x
    for (w, b, gamma, beta) in params:
        hb = h.astype(jnp.bfloat16).astype(jnp.float32)
        wb = w.astype(jnp.bfloat16).astype(jnp.float32)
        y = jnp.dot(hb, wb.T, precision=jax.lax.Precision.HIGHEST) + b
        mean = jnp.mean(y, axis=0, keepdims=True)
        var = jnp.mean((y - mean) ** 2, axis=0, keepdims=True)
        y_hat = (y - mean) / jnp.sqrt(var + BN_EPS)
        h = jnp.maximum(y_hat * gamma + beta, 0.0)
    return h


if __name__ == "__main__":
    batch, cells, hidden_size, layers = 8, 16, 32, 2

    key = jax.random.PRNGKey(0)
    key, kx = jax.random.split(key)
    x = jax.random.normal(kx, (batch, cells), jnp.float32)
    params = init_params(key, cells, hidden_size, layers)
    packed = pack_params(params, cells, hidden_size)

    out = place_processor_forward(x, packed, hidden_size, layers)
    out = jax.block_until_ready(out)

    ref = _reference_forward(x, params)
    assert out.shape == (batch, hidden_size)
    assert jnp.allclose(out, ref, atol=2e-3, rtol=2e-3), "mismatch vs reference"

    print("KERNEL_OK")
</pallas_src>

<mosaic_0001>
module attributes {stable_mosaic.version = 11 : i64} {
  func.func @_layer_kernel(%arg0: i32, %arg1: memref<8x128xbf16, #tpu.memory_space<vmem>>, %arg2: memref<128x128xbf16, #tpu.memory_space<vmem>>, %arg3: memref<1x128xf32, #tpu.memory_space<vmem>>, %arg4: memref<1x128xf32, #tpu.memory_space<vmem>>, %arg5: memref<1x128x128xbf16, #tpu.memory_space<vmem>>, %arg6: memref<1x1x128xf32, #tpu.memory_space<vmem>>, %arg7: memref<1x1x128xf32, #tpu.memory_space<vmem>>, %arg8: memref<8x128xf32, #tpu.memory_space<vmem>>, %arg9: memref<8x128xf32, #tpu.memory_space<vmem>>) attributes {dimension_semantics = [#tpu.dimension_semantics<arbitrary>], iteration_bounds = array<i64: 3>, scalar_prefetch = 0 : i64, scratch_operands = 1 : i64, tpu.core_type = #tpu.core_type<tc>, window_params = [{pipeline_mode = #tpu.pipeline_mode<synchronous>, transform_indices = @transform_0, window_bounds = array<i64: 8, 128>}, {pipeline_mode = #tpu.pipeline_mode<synchronous>, transform_indices = @transform_1, window_bounds = array<i64: 128, 128>}, {pipeline_mode = #tpu.pipeline_mode<synchronous>, transform_indices = @transform_2, window_bounds = array<i64: 1, 128>}, {pipeline_mode = #tpu.pipeline_mode<synchronous>, transform_indices = @transform_3, window_bounds = array<i64: 1, 128>}, {transform_indices = @transform_4, window_bounds = array<i64: 1, 128, 128>}, {transform_indices = @transform_5, window_bounds = array<i64: 1, 1, 128>}, {transform_indices = @transform_6, window_bounds = array<i64: 1, 1, 128>}, {pipeline_mode = #tpu.pipeline_mode<synchronous>, transform_indices = @transform_7, window_bounds = array<i64: 8, 128>}]} {
    %0 = tpu.iota {dimensions = array<i32: 0>} : vector<8x1xi32>
    %c8_i32 = arith.constant 8 : i32
    %1 = vector.broadcast %c8_i32 : i32 to vector<8x1xi32>
    %2 = arith.cmpi slt, %0, %1 : vector<8x1xi32>
    %c0_i32 = arith.constant 0 : i32
    %3 = arith.cmpi eq, %arg0, %c0_i32 : i32
    %4 = arith.extui %3 : i1 to i32
    %c0_i32_0 = arith.constant 0 : i32
    %5 = arith.cmpi ne, %4, %c0_i32_0 : i32
    scf.if %5 {
      %c0 = arith.constant 0 : index
      %c0_4 = arith.constant 0 : index
      %12 = vector.load %arg1[%c0, %c0_4] : memref<8x128xbf16, #tpu.memory_space<vmem>>, vector<8x128xbf16>
      %c0_5 = arith.constant 0 : index
      %c0_6 = arith.constant 0 : index
      %13 = vector.load %arg2[%c0_5, %c0_6] : memref<128x128xbf16, #tpu.memory_space<vmem>>, vector<128x128xbf16>
      %cst = arith.constant dense<0.000000e+00> : vector<8x128xf32>
      %14 = tpu.matmul %12, %13, %cst {dimension_numbers = #tpu.dot_dimension_numbers<[1], [0], [0], [1], [0, 0, 1, 1], [], []>} : vector<8x128xbf16>, vector<128x128xbf16>, vector<8x128xf32> -> vector<8x128xf32>
      %c0_7 = arith.constant 0 : index
      %c0_8 = arith.constant 0 : index
      %15 = vector.load %arg3[%c0_7, %c0_8] : memref<1x128xf32, #tpu.memory_space<vmem>>, vector<1x128xf32>
      %c0_9 = arith.constant 0 : index
      %c0_10 = arith.constant 0 : index
      %16 = vector.load %arg4[%c0_9, %c0_10] : memref<1x128xf32, #tpu.memory_space<vmem>>, vector<1x128xf32>
      %cst_11 = arith.constant dense<0.000000e+00> : vector<128xf32>
      %17 = vector.multi_reduction <add>, %14, %cst_11 [0] : vector<8x128xf32> to vector<128xf32>
      %18 = vector.shape_cast %17 : vector<128xf32> to vector<1x128xf32>
      %cst_12 = arith.constant 1.250000e-01 : f32
      %19 = vector.broadcast %cst_12 : f32 to vector<1x128xf32>
      %20 = arith.mulf %18, %19 : vector<1x128xf32>
      %21 = vector.broadcast %20 : vector<1x128xf32> to vector<8x128xf32>
      %22 = arith.subf %14, %21 : vector<8x128xf32>
      %cst_13 = arith.constant 0.000000e+00 : f32
      %23 = vector.shape_cast %2 : vector<8x1xi1> to vector<8x1xi1>
      %24 = vector.broadcast %23 : vector<8x1xi1> to vector<8x128xi1>
      %25 = vector.broadcast %cst_13 : f32 to vector<8x128xf32>
      %26 = arith.select %24, %22, %25 : vector<8x128xi1>, vector<8x128xf32>
      %27 = arith.mulf %26, %26 : vector<8x128xf32>
      %cst_14 = arith.constant dense<0.000000e+00> : vector<128xf32>
      %28 = vector.multi_reduction <add>, %27, %cst_14 [0] : vector<8x128xf32> to vector<128xf32>
      %29 = vector.shape_cast %28 : vector<128xf32> to vector<1x128xf32>
      %cst_15 = arith.constant 1.250000e-01 : f32
      %30 = vector.broadcast %cst_15 : f32 to vector<1x128xf32>
      %31 = arith.mulf %29, %30 : vector<1x128xf32>
      %cst_16 = arith.constant 9.99999974E-6 : f32
      %32 = vector.broadcast %cst_16 : f32 to vector<1x128xf32>
      %33 = arith.addf %31, %32 : vector<1x128xf32>
      %34 = math.rsqrt %33 : vector<1x128xf32>
      %35 = arith.mulf %15, %34 : vector<1x128xf32>
      %36 = vector.broadcast %35 : vector<1x128xf32> to vector<8x128xf32>
      %37 = arith.mulf %22, %36 : vector<8x128xf32>
      %38 = vector.broadcast %16 : vector<1x128xf32> to vector<8x128xf32>
      %39 = arith.addf %37, %38 : vector<8x128xf32>
      %cst_17 = arith.constant 0.000000e+00 : f32
      %40 = vector.broadcast %cst_17 : f32 to vector<8x128xf32>
      %41 = arith.maximumf %39, %40 : vector<8x128xf32>
      %cst_18 = arith.constant 0.000000e+00 : f32
      %42 = vector.shape_cast %2 : vector<8x1xi1> to vector<8x1xi1>
      %43 = vector.broadcast %42 : vector<8x1xi1> to vector<8x128xi1>
      %44 = vector.broadcast %cst_18 : f32 to vector<8x128xf32>
      %45 = arith.select %43, %41, %44 : vector<8x128xi1>, vector<8x128xf32>
      %c0_19 = arith.constant 0 : index
      %c0_20 = arith.constant 0 : index
      %46 = vector.load %arg9[%c0_19, %c0_20] : memref<8x128xf32, #tpu.memory_space<vmem>>, vector<8x128xf32>
      tpu.vector_store %arg9[%c0_19, %c0_20], %45 {strides = array<i32>} : memref<8x128xf32, #tpu.memory_space<vmem>>, vector<8x128xf32>,
    } else {
    }
    %c0_i32_1 = arith.constant 0 : i32
    %6 = arith.cmpi sgt, %arg0, %c0_i32_1 : i32
    %7 = arith.extui %6 : i1 to i32
    %c0_i32_2 = arith.constant 0 : i32
    %8 = arith.cmpi ne, %7, %c0_i32_2 : i32
    scf.if %8 {
      %c0 = arith.constant 0 : index
      %c0_4 = arith.constant 0 : index
      %12 = vector.load %arg9[%c0, %c0_4] : memref<8x128xf32, #tpu.memory_space<vmem>>, vector<8x128xf32>
      %13 = arith.truncf %12 : vector<8x128xf32> to vector<8x128xbf16>
      %c0_5 = arith.constant 0 : index
      %c0_6 = arith.constant 0 : index
      %c0_7 = arith.constant 0 : index
      %14 = vector.load %arg5[%c0_5, %c0_6, %c0_7] : memref<1x128x128xbf16, #tpu.memory_space<vmem>>, vector<1x128x128xbf16>
      %15 = vector.shape_cast %14 : vector<1x128x128xbf16> to vector<128x128xbf16>
      %cst = arith.constant dense<0.000000e+00> : vector<8x128xf32>
      %16 = tpu.matmul %13, %15, %cst {dimension_numbers = #tpu.dot_dimension_numbers<[1], [0], [0], [1], [0, 0, 1, 1], [], []>} : vector<8x128xbf16>, vector<128x128xbf16>, vector<8x128xf32> -> vector<8x128xf32>
      %c0_8 = arith.constant 0 : index
      %c0_9 = arith.constant 0 : index
      %c0_10 = arith.constant 0 : index
      %17 = vector.load %arg6[%c0_8, %c0_9, %c0_10] : memref<1x1x128xf32, #tpu.memory_space<vmem>>, vector<1x1x128xf32>
      %18 = vector.shape_cast %17 : vector<1x1x128xf32> to vector<1x128xf32>
      %c0_11 = arith.constant 0 : index
      %c0_12 = arith.constant 0 : index
      %c0_13 = arith.constant 0 : index
      %19 = vector.load %arg7[%c0_11, %c0_12, %c0_13] : memref<1x1x128xf32, #tpu.memory_space<vmem>>, vector<1x1x128xf32>
      %20 = vector.shape_cast %19 : vector<1x1x128xf32> to vector<1x128xf32>
      %cst_14 = arith.constant dense<0.000000e+00> : vector<128xf32>
      %21 = vector.multi_reduction <add>, %16, %cst_14 [0] : vector<8x128xf32> to vector<128xf32>
      %22 = vector.shape_cast %21 : vector<128xf32> to vector<1x128xf32>
      %cst_15 = arith.constant 1.250000e-01 : f32
      %23 = vector.broadcast %cst_15 : f32 to vector<1x128xf32>
      %24 = arith.mulf %22, %23 : vector<1x128xf32>
      %25 = vector.broadcast %24 : vector<1x128xf32> to vector<8x128xf32>
      %26 = arith.subf %16, %25 : vector<8x128xf32>
      %cst_16 = arith.constant 0.000000e+00 : f32
      %27 = vector.shape_cast %2 : vector<8x1xi1> to vector<8x1xi1>
      %28 = vector.broadcast %27 : vector<8x1xi1> to vector<8x128xi1>
      %29 = vector.broadcast %cst_16 : f32 to vector<8x128xf32>
      %30 = arith.select %28, %26, %29 : vector<8x128xi1>, vector<8x128xf32>
      %31 = arith.mulf %30, %30 : vector<8x128xf32>
      %cst_17 = arith.constant dense<0.000000e+00> : vector<128xf32>
      %32 = vector.multi_reduction <add>, %31, %cst_17 [0] : vector<8x128xf32> to vector<128xf32>
      %33 = vector.shape_cast %32 : vector<128xf32> to vector<1x128xf32>
      %cst_18 = arith.constant 1.250000e-01 : f32
      %34 = vector.broadcast %cst_18 : f32 to vector<1x128xf32>
      %35 = arith.mulf %33, %34 : vector<1x128xf32>
      %cst_19 = arith.constant 9.99999974E-6 : f32
      %36 = vector.broadcast %cst_19 : f32 to vector<1x128xf32>
      %37 = arith.addf %35, %36 : vector<1x128xf32>
      %38 = math.rsqrt %37 : vector<1x128xf32>
      %39 = arith.mulf %18, %38 : vector<1x128xf32>
      %40 = vector.broadcast %39 : vector<1x128xf32> to vector<8x128xf32>
      %41 = arith.mulf %26, %40 : vector<8x128xf32>
      %42 = vector.broadcast %20 : vector<1x128xf32> to vector<8x128xf32>
      %43 = arith.addf %41, %42 : vector<8x128xf32>
      %cst_20 = arith.constant 0.000000e+00 : f32
      %44 = vector.broadcast %cst_20 : f32 to vector<8x128xf32>
      %45 = arith.maximumf %43, %44 : vector<8x128xf32>
      %cst_21 = arith.constant 0.000000e+00 : f32
      %46 = vector.shape_cast %2 : vector<8x1xi1> to vector<8x1xi1>
      %47 = vector.broadcast %46 : vector<8x1xi1> to vector<8x128xi1>
      %48 = vector.broadcast %cst_21 : f32 to vector<8x128xf32>
      %49 = arith.select %47, %45, %48 : vector<8x128xi1>, vector<8x128xf32>
      %c0_22 = arith.constant 0 : index
      %c0_23 = arith.constant 0 : index
      %50 = vector.load %arg9[%c0_22, %c0_23] : memref<8x128xf32, #tpu.memory_space<vmem>>, vector<8x128xf32>
      tpu.vector_store %arg9[%c0_22, %c0_23], %49 {strides = array<i32>} : memref<8x128xf32, #tpu.memory_space<vmem>>, vector<8x128xf32>,
    } else {
    }
    %c2_i32 = arith.constant 2 : i32
    %9 = arith.cmpi eq, %arg0, %c2_i32 : i32
    %10 = arith.extui %9 : i1 to i32
    %c0_i32_3 = arith.constant 0 : i32
    %11 = arith.cmpi ne, %10, %c0_i32_3 : i32
    scf.if %11 {
      %c0 = arith.constant 0 : index
      %c0_4 = arith.constant 0 : index
      %12 = vector.load %arg9[%c0, %c0_4] : memref<8x128xf32, #tpu.memory_space<vmem>>, vector<8x128xf32>
      %c0_5 = arith.constant 0 : index
      %c0_6 = arith.constant 0 : index
      %13 = vector.load %arg8[%c0_5, %c0_6] : memref<8x128xf32, #tpu.memory_space<vmem>>, vector<8x128xf32>
      tpu.vector_store %arg8[%c0_5, %c0_6], %12 {strides = array<i32>} : memref<8x128xf32, #tpu.memory_space<vmem>>, vector<8x128xf32>,
    } else {
    }
    return
  }
  func.func @transform_0(%arg0: i32) -> (i32, i32) {
    %c0_i32 = arith.constant 0 : i32
    %c0_i32_0 = arith.constant 0 : i32
    %c0_i32_1 = arith.constant 0 : i32
    return %c0_i32, %c0_i32_0 : i32, i32
  }
  func.func @transform_1(%arg0: i32) -> (i32, i32) {
    %c0_i32 = arith.constant 0 : i32
    %c0_i32_0 = arith.constant 0 : i32
    %c0_i32_1 = arith.constant 0 : i32
    return %c0_i32, %c0_i32_0 : i32, i32
  }
  func.func @transform_2(%arg0: i32) -> (i32, i32) {
    %c0_i32 = arith.constant 0 : i32
    %c0_i32_0 = arith.constant 0 : i32
    %c0_i32_1 = arith.constant 0 : i32
    return %c0_i32, %c0_i32_0 : i32, i32
  }
  func.func @transform_3(%arg0: i32) -> (i32, i32) {
    %c0_i32 = arith.constant 0 : i32
    %c0_i32_0 = arith.constant 0 : i32
    %c0_i32_1 = arith.constant 0 : i32
    return %c0_i32, %c0_i32_0 : i32, i32
  }
  func.func @transform_4(%arg0: i32) -> (i32, i32, i32) {
    %c1_i32 = arith.constant 1 : i32
    %0 = arith.subi %arg0, %c1_i32 : i32
    %c0_i32 = arith.constant 0 : i32
    %1 = arith.maxsi %0, %c0_i32 : i32
    %c0_i32_0 = arith.constant 0 : i32
    %c0_i32_1 = arith.constant 0 : i32
    %c0_i32_2 = arith.constant 0 : i32
    return %1, %c0_i32_0, %c0_i32_1 : i32, i32, i32
  }
  func.func @transform_5(%arg0: i32) -> (i32, i32, i32) {
    %c1_i32 = arith.constant 1 : i32
    %0 = arith.subi %arg0, %c1_i32 : i32
    %c0_i32 = arith.constant 0 : i32
    %1 = arith.maxsi %0, %c0_i32 : i32
    %c0_i32_0 = arith.constant 0 : i32
    %c0_i32_1 = arith.constant 0 : i32
    %c0_i32_2 = arith.constant 0 : i32
    return %1, %c0_i32_0, %c0_i32_1 : i32, i32, i32
  }
  func.func @transform_6(%arg0: i32) -> (i32, i32, i32) {
    %c1_i32 = arith.constant 1 : i32
    %0 = arith.subi %arg0, %c1_i32 : i32
    %c0_i32 = arith.constant 0 : i32
    %1 = arith.maxsi %0, %c0_i32 : i32
    %c0_i32_0 = arith.constant 0 : i32
    %c0_i32_1 = arith.constant 0 : i32
    %c0_i32_2 = arith.constant 0 : i32
    return %1, %c0_i32_0, %c0_i32_1 : i32, i32, i32
  }
  func.func @transform_7(%arg0: i32) -> (i32, i32) {
    %c0_i32 = arith.constant 0 : i32
    %c0_i32_0 = arith.constant 0 : i32
    %c0_i32_1 = arith.constant 0 : i32
    return %c0_i32, %c0_i32_0 : i32, i32
  }
}

</mosaic_0001>

<llo_original>
// kernel: place_processor_forward.1
$region0: #{place_processor_forward.1}
  #allocation0 [shape = 'u32[]', space=smem, size = 0x4, offset = 0x4, fixed_abs, tag = 'smem constant byte address 0x4 - core index']
  #allocation1 [shape = 'u32[144,128]{1,0:T(1,128)}', space=vmem, size = 0x12000, scoped, tag = 'internal scratch']
  #allocation2 [shape = 'f32[8,128]{1,0:T(8,128)}', space=vmem, size = 0x1000, scoped, tag = 'scratch operand']
  %s0 = inlined_call_operand.vmem [shape: bf16[8,128], index: 0, kind: input, shape index: {}]
  %s1 = inlined_call_operand.hbm [shape: bf16[128,128], index: 1, kind: input, shape index: {}]
  %s2 = inlined_call_operand.vmem [shape: f32[1,128], index: 2, kind: input, shape index: {}]
  %s3 = inlined_call_operand.vmem [shape: f32[1,128], index: 3, kind: input, shape index: {}]
  %s4 = inlined_call_operand.hbm [shape: bf16[2,128,128], index: 4, kind: input, shape index: {}]
  %s5 = inlined_call_operand.vmem [shape: f32[2,1,128], index: 5, kind: input, shape index: {}]
  %s6 = inlined_call_operand.vmem [shape: f32[2,1,128], index: 6, kind: input, shape index: {}]
  %s7 = inlined_call_operand.hbm [shape: f32[8,128], index: 7, kind: output, shape index: {}]
  %s8 = sld [smem:[#allocation0]]
  $region81: #{place_processor_forward.1} parent=0
    _
  %s10 = ssub.s32 1, %s8
  %s11 = scalar_select 0, %s10, %s8
  $region1: #{place_processor_forward.1} parent=0
    #allocation3 [shape = 'u8[32768]{0}', space=vmem, size = 0x8000, scoped, tag = 'input window, operand 1, single buffered']
    #allocation4 [shape = 's32[2]{0}', space=sflag, size = 0x8, scoped, tag = 'scoped memory for place_processor_forward.1']
    #allocation5 [shape = 's32[2]{0}', space=sflag, size = 0x8, scoped, tag = 'scoped memory for place_processor_forward.1']
    #allocation6 [shape = 'u8[65536]{0}', space=vmem, size = 0x10000, scoped, tag = 'input window, operand 4']
    #allocation7 [shape = 's32[2]{0}', space=sflag, size = 0x8, scoped, tag = 'scoped memory for place_processor_forward.1']
    #allocation8 [shape = 'u8[4096]{0}', space=vmem, size = 0x1000, scoped, tag = 'output window, operand 0, single buffered']
    %12 = vsyncpa [#allocation4], 0
    %13 = vsyncpa [#allocation7], 0
    %s14 = scalar_lea.sflag [#allocation7], 1
    %15 = vsyncpa %s14, 0
    %16 = vsyncpa [#allocation5], 0
    loop: start=0, step=1, limit=5
    $region2: #{place_processor_forward.1} parent=1 // loop_pre_header
      _
    $region3: #{place_processor_forward.1} parent=1 // loop_header
      %s18 = sphi 0, %s22
      %p19 = scmp.ge.s32.totalorder %s18, 5
      %s26 = sphi 0, %s26
      %s28 = sphi 0, %s26
      %s29 = sphi 0, %s28
      %s43 = sphi 0, %s29
      %s47 = sphi 0, %s47
      %s49 = sphi 0, %s47
      %s50 = sphi 0, %s49
      %s64 = sphi 0, %s50
      %s68 = sphi 0, %s68
      %s70 = sphi 0, %s68
      %s71 = sphi 0, %s70
      %s85 = sphi 0, %s71
      %s89 = sphi 0, %s89
      %s91 = sphi 0, %s89
      %s92 = sphi 0, %s91
      %s106 = sphi 0, %s92
      %s118 = sphi 0, %s120
      %s121 = sphi 0, %s118
      %s122 = sphi 0, %s121
      %s138 = sphi 0, %s122
      %s150 = sphi 0, %s152
      %s153 = sphi 0, %s150
      %s154 = sphi 0, %s153
      %s170 = sphi 0, %s154
      %s182 = sphi 0, %s184
      %s185 = sphi 0, %s182
      %s186 = sphi 0, %s185
      %s202 = sphi 0, %s186
      %s206 = sphi 0, %s206
      %s208 = sphi 0, %s206
      %s209 = sphi 0, %s208
      %s223 = sphi 0, %s209
    $region4: #{place_processor_forward.1} parent=1 // loop_header_branch
      %21 = sbr.rel (%p19) target = $region8
    $region5: #{place_processor_forward.1} parent=1 // loop_body
      %s23 = ssub.s32 %s18, 1
      %s24 = ssub.s32 %s18, 2
      %s25 = sadd.s32 %s18, 1
      %s27 = sadd.s32 %s26, 1
      %p30 = scmp.eq.s32.totalorder %s18, 2
      %p31 = scmp.ne.s32.totalorder %s26, %s28
      %p32 = scmp.eq.s32.totalorder %s18, 0
      %p33 = por %p31, %p32
      %p34 = scmp.ne.s32.totalorder %s26, %s28
      %p35 = scmp.eq.s32.totalorder %s23, 2
      %p36 = por %p34, %p35
      %p37 = scmp.ne.s32.totalorder %s28, %s29
      %p38 = scmp.eq.s32.totalorder %s23, 0
      %p39 = por %p37, %p38
      %p40 = scmp.ne.s32.totalorder %s28, %s29
      %p41 = scmp.eq.s32.totalorder %s24, 2
      %p42 = por %p40, %p41
      %p44 = scmp.ne.s32.totalorder %s29, %s43
      %p45 = scmp.eq.s32.totalorder %s24, 0
      %p46 = por %p44, %p45
      %s48 = sadd.s32 %s47, 1
      %p51 = scmp.eq.s32.totalorder %s18, 2
      %p52 = scmp.ne.s32.totalorder %s47, %s49
      %p53 = scmp.eq.s32.totalorder %s18, 0
      %p54 = por %p52, %p53
      %p55 = scmp.ne.s32.totalorder %s47, %s49
      %p56 = scmp.eq.s32.totalorder %s23, 2
      %p57 = por %p55, %p56
      %p58 = scmp.ne.s32.totalorder %s49, %s50
      %p59 = scmp.eq.s32.totalorder %s23, 0
      %p60 = por %p58, %p59
      %p61 = scmp.ne.s32.totalorder %s49, %s50
      %p62 = scmp.eq.s32.totalorder %s24, 2
      %p63 = por %p61, %p62
      %p65 = scmp.ne.s32.totalorder %s50, %s64
      %p66 = scmp.eq.s32.totalorder %s24, 0
      %p67 = por %p65, %p66
      %s69 = sadd.s32 %s68, 1
      %p72 = scmp.eq.s32.totalorder %s18, 2
      %p73 = scmp.ne.s32.totalorder %s68, %s70
      %p74 = scmp.eq.s32.totalorder %s18, 0
      %p75 = por %p73, %p74
      %p76 = scmp.ne.s32.totalorder %s68, %s70
      %p77 = scmp.eq.s32.totalorder %s23, 2
      %p78 = por %p76, %p77
      %p79 = scmp.ne.s32.totalorder %s70, %s71
      %p80 = scmp.eq.s32.totalorder %s23, 0
      %p81 = por %p79, %p80
      %p82 = scmp.ne.s32.totalorder %s70, %s71
      %p83 = scmp.eq.s32.totalorder %s24, 2
      %p84 = por %p82, %p83
      %p86 = scmp.ne.s32.totalorder %s71, %s85
      %p87 = scmp.eq.s32.totalorder %s24, 0
      %p88 = por %p86, %p87
      %s90 = sadd.s32 %s89, 1
      %p93 = scmp.eq.s32.totalorder %s18, 2
      %p94 = scmp.ne.s32.totalorder %s89, %s91
      %p95 = scmp.eq.s32.totalorder %s18, 0
      %p96 = por %p94, %p95
      %p97 = scmp.ne.s32.totalorder %s89, %s91
      %p98 = scmp.eq.s32.totalorder %s23, 2
      %p99 = por %p97, %p98
      %p100 = scmp.ne.s32.totalorder %s91, %s92
      %p101 = scmp.eq.s32.totalorder %s23, 0
      %p102 = por %p100, %p101
      %p103 = scmp.ne.s32.totalorder %s91, %s92
      %p104 = scmp.eq.s32.totalorder %s24, 2
      %p105 = por %p103, %p104
      %p107 = scmp.ne.s32.totalorder %s92, %s106
      %p108 = scmp.eq.s32.totalorder %s24, 0
      %p109 = por %p107, %p108
      %s110 = ssub.s32 %s18, 1
      %p111 = scmp.gt.s32.totalorder %s110, 0
      %s112 = scalar_select %p111, %s110, 0
      %s113 = ssub.s32 %s25, 1
      %p114 = scmp.gt.s32.totalorder %s113, 0
      %s115 = scalar_select %p114, %s113, 0
      %s116 = ssub.s32 %s112, %s115
      %p117 = scmp.eq.s32.totalorder %s116, 0
      %s119 = sadd.s32 %s118, 1
      %s120 = scalar_select %p117, %s118, %s119
      %p123 = pneg %p117
      %p124 = scmp.eq.s32.totalorder %s18, 2
      %p125 = por %p123, %p124
      %p126 = scmp.ne.s32.totalorder %s118, %s121
      %p127 = scmp.eq.s32.totalorder %s18, 0
      %p128 = por %p126, %p127
      %p129 = scmp.ne.s32.totalorder %s118, %s121
      %p130 = scmp.eq.s32.totalorder %s23, 2
      %p131 = por %p129, %p130
      %p132 = scmp.ne.s32.totalorder %s121, %s122
      %p133 = scmp.eq.s32.totalorder %s23, 0
      %p134 = por %p132, %p133
      %p135 = scmp.ne.s32.totalorder %s121, %s122
      %p136 = scmp.eq.s32.totalorder %s24, 2
      %p137 = por %p135, %p136
      %p139 = scmp.ne.s32.totalorder %s122, %s138
      %p140 = scmp.eq.s32.totalorder %s24, 0
      %p141 = por %p139, %p140
      %s142 = ssub.s32 %s18, 1
      %p143 = scmp.gt.s32.totalorder %s142, 0
      %s144 = scalar_select %p143, %s142, 0
      %s145 = ssub.s32 %s25, 1
      %p146 = scmp.gt.s32.totalorder %s145, 0
      %s147 = scalar_select %p146, %s145, 0
      %s148 = ssub.s32 %s144, %s147
      %p149 = scmp.eq.s32.totalorder %s148, 0
      %s151 = sadd.s32 %s150, 1
      %s152 = scalar_select %p149, %s150, %s151
      %p155 = pneg %p149
      %p156 = scmp.eq.s32.totalorder %s18, 2
      %p157 = por %p155, %p156
      %p158 = scmp.ne.s32.totalorder %s150, %s153
      %p159 = scmp.eq.s32.totalorder %s18, 0
      %p160 = por %p158, %p159
      %p161 = scmp.ne.s32.totalorder %s150, %s153
      %p162 = scmp.eq.s32.totalorder %s23, 2
      %p163 = por %p161, %p162
      %p164 = scmp.ne.s32.totalorder %s153, %s154
      %p165 = scmp.eq.s32.totalorder %s23, 0
      %p166 = por %p164, %p165
      %p167 = scmp.ne.s32.totalorder %s153, %s154
      %p168 = scmp.eq.s32.totalorder %s24, 2
      %p169 = por %p167, %p168
      %p171 = scmp.ne.s32.totalorder %s154, %s170
      %p172 = scmp.eq.s32.totalorder %s24, 0
      %p173 = por %p171, %p172
      %s174 = ssub.s32 %s18, 1
      %p175 = scmp.gt.s32.totalorder %s174, 0
      %s176 = scalar_select %p175, %s174, 0
      %s177 = ssub.s32 %s25, 1
      %p178 = scmp.gt.s32.totalorder %s177, 0
      %s179 = scalar_select %p178, %s177, 0
      %s180 = ssub.s32 %s176, %s179
      %p181 = scmp.eq.s32.totalorder %s180, 0
      %s183 = sadd.s32 %s182, 1
      %s184 = scalar_select %p181, %s182, %s183
      %p187 = pneg %p181
      %p188 = scmp.eq.s32.totalorder %s18, 2
      %p189 = por %p187, %p188
      %p190 = scmp.ne.s32.totalorder %s182, %s185
      %p191 = scmp.eq.s32.totalorder %s18, 0
      %p192 = por %p190, %p191
      %p193 = scmp.ne.s32.totalorder %s182, %s185
      %p194 = scmp.eq.s32.totalorder %s23, 2
      %p195 = por %p193, %p194
      %p196 = scmp.ne.s32.totalorder %s185, %s186
      %p197 = scmp.eq.s32.totalorder %s23, 0
      %p198 = por %p196, %p197
      %p199 = scmp.ne.s32.totalorder %s185, %s186
      %p200 = scmp.eq.s32.totalorder %s24, 2
      %p201 = por %p199, %p200
      %p203 = scmp.ne.s32.totalorder %s186, %s202
      %p204 = scmp.eq.s32.totalorder %s24, 0
      %p205 = por %p203, %p204
      %s207 = sadd.s32 %s206, 1
      %p210 = scmp.eq.s32.totalorder %s18, 2
      %p211 = scmp.ne.s32.totalorder %s206, %s208
      %p212 = scmp.eq.s32.totalorder %s18, 0
      %p213 = por %p211, %p212
      %p214 = scmp.ne.s32.totalorder %s206, %s208
      %p215 = scmp.eq.s32.totalorder %s23, 2
      %p216 = por %p214, %p215
      %p217 = scmp.ne.s32.totalorder %s208, %s209
      %p218 = scmp.eq.s32.totalorder %s23, 0
      %p219 = por %p217, %p218
      %p220 = scmp.ne.s32.totalorder %s208, %s209
      %p221 = scmp.eq.s32.totalorder %s24, 2
      %p222 = por %p220, %p221
      %p224 = scmp.ne.s32.totalorder %s209, %s223
      %p225 = scmp.eq.s32.totalorder %s24, 0
      %p226 = por %p224, %p225
      %p227 = scmp.le.s32.totalorder 1, %s18
      %p228 = scmp.lt.s32.totalorder %s18, 4
      %p229 = pnand %p227, %p228
      %p230 = pneg %p229
      // Predicated region
      $region9: #{place_processor_forward.1} parent=5 // pred_check
        _
      $region10: #{place_processor_forward.1} parent=5 // pred_check_branch
        %232 = sbr.rel (%p229) target = $region12
      $region11: #{place_processor_forward.1} parent=5 // pred_region
        %s233 = ssub.s32 %s18, 1
        // Predicated region
        $region13: #{place_processor_forward.1} parent=11 // pred_check
          %p234 = pneg %p39
        $region14: #{place_processor_forward.1} parent=11 // pred_check_branch
          %236 = sbr.rel (%p234) target = $region16
        $region15: #{place_processor_forward.1} parent=11 // pred_region
          _
        $region16: #{place_processor_forward.1} parent=11 // pred_fallthru
          _
        // Predicated region
        $region17: #{place_processor_forward.1} parent=11 // pred_check
          %p237 = pneg %p60
        $region18: #{place_processor_forward.1} parent=11 // pred_check_branch
          %239 = sbr.rel (%p237) target = $region20
        $region19: #{place_processor_forward.1} parent=11 // pred_region
          %s241 = ssub.s32 1024, 1024
          %242 = vsyncadd [#allocation4], %s241
          %s243 = sshll.u32 [#allocation3], 4
          %s244 = int_to_ptr.vmem [resolvable:$true] %s243
          %249 = dma.hbm_to_vmem [thread:$0]  %s1, 1024, %s244, [#allocation4], 64, 64, 4
        $region20: #{place_processor_forward.1} parent=11 // pred_fallthru
          _
        // Predicated region
        $region21: #{place_processor_forward.1} parent=11 // pred_check
          %p250 = pneg %p81
        $region22: #{place_processor_forward.1} parent=11 // pred_check_branch
          %252 = sbr.rel (%p250) target = $region24
        $region23: #{place_processor_forward.1} parent=11 // pred_region
          _
        $region24: #{place_processor_forward.1} parent=11 // pred_fallthru
          _
        // Predicated region
        $region25: #{place_processor_forward.1} parent=11 // pred_check
          %p253 = pneg %p102
        $region26: #{place_processor_forward.1} parent=11 // pred_check_branch
          %255 = sbr.rel (%p253) target = $region28
        $region27: #{place_processor_forward.1} parent=11 // pred_region
          _
        $region28: #{place_processor_forward.1} parent=11 // pred_fallthru
          _
      $region12: #{place_processor_forward.1} parent=5 // pred_fallthru
        _
      %p256 = scmp.lt.s32.totalorder %s18, 3
      // Predicated region
      $region29: #{place_processor_forward.1} parent=5 // pred_check
        %p257 = pneg %p256
      $region30: #{place_processor_forward.1} parent=5 // pred_check_branch
        %259 = sbr.rel (%p257) target = $region32
      $region31: #{place_processor_forward.1} parent=5 // pred_region
        // Predicated region
        $region33: #{place_processor_forward.1} parent=31 // pred_check
          %p260 = pneg %p128
        $region34: #{place_processor_forward.1} parent=31 // pred_check_branch
          %262 = sbr.rel (%p260) target = $region36
        $region35: #{place_processor_forward.1} parent=31 // pred_region
          %s263 = sand.u32 %s118, 1
          %s264 = scalar_lea.sflag [#allocation7], %s263
          %s265 = sand.u32 %s118, 1
          %s266 = smul.addr %s265, 64
          %s267 = scalar_lea.vmem [#allocation6], %s266
          %s268 = ssub.s32 %s18, 1
          %p269 = scmp.gt.s32.totalorder %s268, 0
          %s270 = scalar_select %p269, %s268, 0
          %s272 = ssub.s32 1024, 1024
          %273 = vsyncadd %s264, %s272
          %s274 = smul.addr %s270, 16
          %s275 = smul.addr %s274, 64
          %s276 = scalar_lea.hbm %s4, %s275
          %s277 = sshll.u32 %s267, 4
          %s278 = int_to_ptr.vmem [resolvable:$true] %s277
          %283 = dma.hbm_to_vmem [thread:$0]  %s276, 1024, %s278, %s264, 64, 64, 4
        $region36: #{place_processor_forward.1} parent=31 // pred_fallthru
          _
        // Predicated region
        $region37: #{place_processor_forward.1} parent=31 // pred_check
          %p284 = pneg %p160
        $region38: #{place_processor_forward.1} parent=31 // pred_check_branch
          %286 = sbr.rel (%p284) target = $region40
        $region39: #{place_processor_forward.1} parent=31 // pred_region
          %s287 = ssub.s32 %s18, 1
          %p288 = scmp.gt.s32.totalorder %s287, 0
          %s289 = scalar_select %p288, %s287, 0
          %p290 = scmp.lt.s32.totalorder %s289, 1
          %s291 = scalar_select %p290, %s289, 1
          %s292 = scalar_lea.vmem %s5, %s291
          %s293 = ssub.s32 %s18, 1
          %p294 = scmp.gt.s32.totalorder %s293, 0
          %s295 = scalar_select %p294, %s293, 0
        $region40: #{place_processor_forward.1} parent=31 // pred_fallthru
          _
        // Predicated region
        $region41: #{place_processor_forward.1} parent=31 // pred_check
          %p296 = pneg %p192
        $region42: #{place_processor_forward.1} parent=31 // pred_check_branch
          %298 = sbr.rel (%p296) target = $region44
        $region43: #{place_processor_forward.1} parent=31 // pred_region
          %s299 = ssub.s32 %s18, 1
          %p300 = scmp.gt.s32.totalorder %s299, 0
          %s301 = scalar_select %p300, %s299, 0
          %p302 = scmp.lt.s32.totalorder %s301, 1
          %s303 = scalar_select %p302, %s301, 1
          %s304 = scalar_lea.vmem %s6, %s303
          %s305 = ssub.s32 %s18, 1
          %p306 = scmp.gt.s32.totalorder %s305, 0
          %s307 = scalar_select %p306, %s305, 0
        $region44: #{place_processor_forward.1} parent=31 // pred_fallthru
          _
      $region32: #{place_processor_forward.1} parent=5 // pred_fallthru
        _
      %p308 = scmp.le.s32.totalorder 1, %s18
      %p309 = scmp.lt.s32.totalorder %s18, 4
      %p310 = pnand %p308, %p309
      %p311 = pneg %p310
      // Predicated region
      $region45: #{place_processor_forward.1} parent=5 // pred_check
        _
      $region46: #{place_processor_forward.1} parent=5 // pred_check_branch
        %313 = sbr.rel (%p310) target = $region48
      $region47: #{place_processor_forward.1} parent=5 // pred_region
        %s314 = ssub.s32 %s18, 1
        // Predicated region
        $region49: #{place_processor_forward.1} parent=47 // pred_check
          %p315 = pneg %p60
        $region50: #{place_processor_forward.1} parent=47 // pred_check_branch
          %317 = sbr.rel (%p315) target = $region52
        $region51: #{place_processor_forward.1} parent=47 // pred_region
          %318 = dma.done [#allocation4], 1024
        $region52: #{place_processor_forward.1} parent=47 // pred_fallthru
          _
        %s319 = sand.u32 %s121, 1
        %s320 = scalar_lea.sflag [#allocation7], %s319
        %s321 = sand.u32 %s121, 1
        %s322 = smul.addr %s321, 64
        %s323 = scalar_lea.vmem [#allocation6], %s322
        // Predicated region
        $region53: #{place_processor_forward.1} parent=47 // pred_check
          %p324 = pneg %p134
        $region54: #{place_processor_forward.1} parent=47 // pred_check_branch
          %326 = sbr.rel (%p324) target = $region56
        $region55: #{place_processor_forward.1} parent=47 // pred_region
          %327 = dma.done %s320, 1024
        $region56: #{place_processor_forward.1} parent=47 // pred_fallthru
          _
        %p328 = pneg %p39
        %p329 = pneg %p36
        %p330 = pneg %p60
        %p331 = pneg %p57
        %p332 = pneg %p81
        %p333 = pneg %p78
        %p334 = pneg %p102
        %p335 = pneg %p99
        %s336 = sand.u32 %s121, 1
        %s337 = scalar_lea.sflag [#allocation7], %s336
        %s338 = sand.u32 %s121, 1
        %s339 = smul.addr %s338, 64
        %s340 = scalar_lea.vmem [#allocation6], %s339
        %p341 = pneg %p134
        %p342 = pneg %p131
        %s343 = ssub.s32 %s23, 1
        %p344 = scmp.gt.s32.totalorder %s343, 0
        %s345 = scalar_select %p344, %s343, 0
        %p346 = scmp.lt.s32.totalorder %s345, 1
        %s347 = scalar_select %p346, %s345, 1
        %s348 = scalar_lea.vmem %s5, %s347
        %p349 = pneg %p166
        %p350 = pneg %p163
        %s351 = ssub.s32 %s23, 1
        %p352 = scmp.gt.s32.totalorder %s351, 0
        %s353 = scalar_select %p352, %s351, 0
        %p354 = scmp.lt.s32.totalorder %s353, 1
        %s355 = scalar_select %p354, %s353, 1
        %s356 = scalar_lea.vmem %s6, %s355
        %p357 = pneg %p198
        %p358 = pneg %p195
        %p359 = pneg %p219
        %p360 = pneg %p216
        %s361 = ssub.s32 %s23, 1
        %p362 = scmp.gt.s32.totalorder %s361, 0
        %s363 = scalar_select %p362, %s361, 0
        %s364 = ssub.s32 %s23, 1
        %p365 = scmp.gt.s32.totalorder %s364, 0
        %s366 = scalar_select %p365, %s364, 0
        %p367 = scmp.lt.s32.totalorder %s366, 1
        %s368 = scalar_select %p367, %s366, 1
        %s369 = scalar_lea.vmem %s5, %s368
        %s370 = ssub.s32 %s23, 1
        %p371 = scmp.gt.s32.totalorder %s370, 0
        %s372 = scalar_select %p371, %s370, 0
        %s373 = ssub.s32 %s23, 1
        %p374 = scmp.gt.s32.totalorder %s373, 0
        %s375 = scalar_select %p374, %s373, 0
        %p376 = scmp.lt.s32.totalorder %s375, 1
        %s377 = scalar_select %p376, %s375, 1
        %s378 = scalar_lea.vmem %s6, %s377
        %s379 = ssub.s32 %s23, 1
        %p380 = scmp.gt.s32.totalorder %s379, 0
        %s381 = scalar_select %p380, %s379, 0
        %v383 = vlaneseq
        %v384 = vshrl.u32 %v383, 7
        %vm385 = vcmp.lt.s32.totalorder %v384, 8
        %p386 = scmp.eq.s32.totalorder %s23, 0
        // Predicated region
        $region57: #{place_processor_forward.1} parent=47 // pred_check
          %p387 = pneg %p386
        $region58: #{place_processor_forward.1} parent=47 // pred_check_branch
          %389 = sbr.rel (%p387) target = $region60
        $region59: #{place_processor_forward.1} parent=47 // pred_region
          %v390 = vld [vmem:[%s0] sm:$0xf]
          %v391 = vld [vmem:[#allocation3] sm:$0xf]
          %v392 = vld [vmem:[#allocation3 + $0x4] sm:$0xf]
          %v393 = vld [vmem:[#allocation3 + $0x8] sm:$0xf]
          %v394 = vld [vmem:[#allocation3 + $0xc] sm:$0xf]
          %v395 = vld [vmem:[#allocation3 + $0x10] sm:$0xf]
          %v396 = vld [vmem:[#allocation3 + $0x14] sm:$0xf]
          %v397 = vld [vmem:[#allocation3 + $0x18] sm:$0xf]
          %v398 = vld [vmem:[#allocation3 + $0x1c] sm:$0xf]
          %v399 = vld [vmem:[#allocation3 + $0x20] sm:$0xf]
          %v400 = vld [vmem:[#allocation3 + $0x24] sm:$0xf]
          %v401 = vld [vmem:[#allocation3 + $0x28] sm:$0xf]
          %v402 = vld [vmem:[#allocation3 + $0x2c] sm:$0xf]
          %v403 = vld [vmem:[#allocation3 + $0x30] sm:$0xf]
          %v404 = vld [vmem:[#allocation3 + $0x34] sm:$0xf]
          %v405 = vld [vmem:[#allocation3 + $0x38] sm:$0xf]
          %v406 = vld [vmem:[#allocation3 + $0x3c] sm:$0xf]
          %v423 = vunpack.c.l.b16 %v391
          %v424 = vunpack.c.l.b16 %v392
          %v425 = vunpack.c.l.b16 %v393
          %v426 = vunpack.c.l.b16 %v394
          %v427 = vunpack.c.l.b16 %v395
          %v428 = vunpack.c.l.b16 %v396
          %v429 = vunpack.c.l.b16 %v397
          %v430 = vunpack.c.l.b16 %v398
          %v431 = vunpack.c.l.b16 %v399
          %v432 = vunpack.c.l.b16 %v400
          %v433 = vunpack.c.l.b16 %v401
          %v434 = vunpack.c.l.b16 %v402
          %v435 = vunpack.c.l.b16 %v403
          %v436 = vunpack.c.l.b16 %v404
          %v437 = vunpack.c.l.b16 %v405
          %v438 = vunpack.c.l.b16 %v406
          %v439 = vpack.c.b16 %v424, %v423
          %v440 = vpack.c.b16 %v426, %v425
          %v441 = vpack.c.b16 %v428, %v427
          %v442 = vpack.c.b16 %v430, %v429
          %v443 = vpack.c.b16 %v432, %v431
          %v444 = vpack.c.b16 %v434, %v433
          %v445 = vpack.c.b16 %v436, %v435
          %v446 = vpack.c.b16 %v438, %v437
          %455 = vmatprep.subr.bf16.mxu0 0
          %456 = vmatpush1.bf16.msra.mxu0 %v439
          %457 = vmatprep.subr.bf16.mxu0 0
          %458 = vmatpush1.bf16.msra.mxu0 %v440
          %459 = vmatprep.subr.bf16.mxu0 0
          %460 = vmatpush1.bf16.msra.mxu0 %v441
          %461 = vmatprep.subr.bf16.mxu0 0
          %462 = vmatpush1.bf16.msra.mxu0 %v442
          %463 = vmatprep.subr.bf16.mxu0 0
          %464 = vmatpush1.bf16.msra.mxu0 %v443
          %465 = vmatprep.subr.bf16.mxu0 0
          %466 = vmatpush1.bf16.msra.mxu0 %v444
          %467 = vmatprep.subr.bf16.mxu0 0
          %468 = vmatpush1.bf16.msra.mxu0 %v445
          %469 = vmatprep.subr.bf16.mxu0 0
          %470 = vmatpush1.bf16.msra.mxu0 %v446
          %471 = vmatprep.subr.bf16.mxu0 0
          %472 = vmatpush1.bf16.msra.mxu0 0
          %473 = vmatprep.subr.bf16.mxu0 0
          %474 = vmatpush1.bf16.msra.mxu0 0
          %475 = vmatprep.subr.bf16.mxu0 0
          %476 = vmatpush1.bf16.msra.mxu0 0
          %477 = vmatprep.subr.bf16.mxu0 0
          %478 = vmatpush1.bf16.msra.mxu0 0
          %479 = vmatprep.subr.bf16.mxu0 0
          %480 = vmatpush1.bf16.msra.mxu0 0
          %481 = vmatprep.subr.bf16.mxu0 0
          %482 = vmatpush1.bf16.msra.mxu0 0
          %483 = vmatprep.subr.bf16.mxu0 0
          %484 = vmatpush1.bf16.msra.mxu0 0
          %485 = vmatprep.subr.bf16.mxu0 0
          %486 = vmatpush1.bf16.msra.mxu0 0
          %487 = vmatprep.mubr.bf16.mxu0 0
          %488 = vmatmul.mubr.bf16.gmra.mrb[0].mxu0 %v390
          %v489 = vpop.f32.mrb[0].mxu0
          %v490 = vadd.f32 0.0, %v489
          %v491 = vpop.f32.mrb[0].mxu0
          %v492 = vpop.f32.mrb[0].mxu0
          %v493 = vpop.f32.mrb[0].mxu0
          %494 = vdwg.mxu0
          %v495 = vld [vmem:[%s2] sm:$0x1]
          %v496 = vld [vmem:[%s3] sm:$0x1]
          %v497 = vrot.slane %v490, 4
          %v498 = vadd.f32 %v490, %v497
          %v499 = vrot.slane %v498, 2
          %v500 = vadd.f32 %v498, %v499
          %v501 = vrot.slane %v500, 1
          %v502 = vadd.f32 %v500, %v501
          %v503 = vmul.f32 %v502, 0.125
          %v504 = vsub.f32 %v490, %v503
          %v505 = vsel %vm385, 1, 0
          %vm506 = vcmp.eq.s32.totalorder %v505, 1
          %v507 = vsel %vm506, %v504, 0.0
          %v508 = vmul.f32 %v507, %v507
          %v509 = vrot.slane %v508, 4
          %v510 = vadd.f32 %v508, %v509
          %v511 = vrot.slane %v510, 2
          %v512 = vadd.f32 %v510, %v511
          %v513 = vrot.slane %v512, 1
          %v514 = vadd.f32 %v512, %v513
          %v515 = vmul.f32 %v514, 0.125
          %v516 = vadd.f32 %v515, 1e-05
          %v517 = vrsqrt.pop %v516
          %v518 = vmul.f32 %v495, %v517
          %v520 = vlaneseq
          %v521 = vshrl.u32 %v520, 7
          %v522 = vsub.s32 0, %v521
          %v523 = vrot.slane %v518, %v522
          %v525 = vmul.f32 %v504, %v523
          %v527 = vlaneseq
          %v528 = vshrl.u32 %v527, 7
          %v529 = vsub.s32 0, %v528
          %v530 = vrot.slane %v496, %v529
          %v532 = vadd.f32 %v525, %v530
          %v533 = vmax.f32 %v532, 0.0
          %v534 = vsel %vm506, %v533, 0.0
          %535 = vst [vmem:[#allocation2] sm:$0xff] %v534
        $region60: #{place_processor_forward.1} parent=47 // pred_fallthru
          _
        %p536 = scmp.gt.s32.totalorder %s23, 0
        // Predicated region
        $region61: #{place_processor_forward.1} parent=47 // pred_check
          %p537 = pneg %p536
        $region62: #{place_processor_forward.1} parent=47 // pred_check_branch
          %539 = sbr.rel (%p537) target = $region64
        $region63: #{place_processor_forward.1} parent=47 // pred_region
          %v540 = vld [vmem:[#allocation2] sm:$0xff]
          %v541 = vpack.c.bf16 %v540, %v540
          %v542 = vld [vmem:[%s323] sm:$0xf]
          %v543 = vld [vmem:[%s323 + $0x4] sm:$0xf]
          %v544 = vld [vmem:[%s323 + $0x8] sm:$0xf]
          %v545 = vld [vmem:[%s323 + $0xc] sm:$0xf]
          %v546 = vld [vmem:[%s323 + $0x10] sm:$0xf]
          %v547 = vld [vmem:[%s323 + $0x14] sm:$0xf]
          %v548 = vld [vmem:[%s323 + $0x18] sm:$0xf]
          %v549 = vld [vmem:[%s323 + $0x1c] sm:$0xf]
          %v550 = vld [vmem:[%s323 + $0x20] sm:$0xf]
          %v551 = vld [vmem:[%s323 + $0x24] sm:$0xf]
          %v552 = vld [vmem:[%s323 + $0x28] sm:$0xf]
          %v553 = vld [vmem:[%s323 + $0x2c] sm:$0xf]
          %v554 = vld [vmem:[%s323 + $0x30] sm:$0xf]
          %v555 = vld [vmem:[%s323 + $0x34] sm:$0xf]
          %v556 = vld [vmem:[%s323 + $0x38] sm:$0xf]
          %v557 = vld [vmem:[%s323 + $0x3c] sm:$0xf]
          %v574 = vunpack.c.l.b16 %v542
          %v575 = vunpack.c.l.b16 %v543
          %v576 = vunpack.c.l.b16 %v544
          %v577 = vunpack.c.l.b16 %v545
          %v578 = vunpack.c.l.b16 %v546
          %v579 = vunpack.c.l.b16 %v547
          %v580 = vunpack.c.l.b16 %v548
          %v581 = vunpack.c.l.b16 %v549
          %v582 = vunpack.c.l.b16 %v550
          %v583 = vunpack.c.l.b16 %v551
          %v584 = vunpack.c.l.b16 %v552
          %v585 = vunpack.c.l.b16 %v553
          %v586 = vunpack.c.l.b16 %v554
          %v587 = vunpack.c.l.b16 %v555
          %v588 = vunpack.c.l.b16 %v556
          %v589 = vunpack.c.l.b16 %v557
          %v590 = vpack.c.b16 %v575, %v574
          %v591 = vpack.c.b16 %v577, %v576
          %v592 = vpack.c.b16 %v579, %v578
          %v593 = vpack.c.b16 %v581, %v580
          %v594 = vpack.c.b16 %v583, %v582
          %v595 = vpack.c.b16 %v585, %v584
          %v596 = vpack.c.b16 %v587, %v586
          %v597 = vpack.c.b16 %v589, %v588
          %606 = vmatprep.subr.bf16.mxu0 0
          %607 = vmatpush1.bf16.msra.mxu0 %v590
          %608 = vmatprep.subr.bf16.mxu0 0
          %609 = vmatpush1.bf16.msra.mxu0 %v591
          %610 = vmatprep.subr.bf16.mxu0 0
          %611 = vmatpush1.bf16.msra.mxu0 %v592
          %612 = vmatprep.subr.bf16.mxu0 0
          %613 = vmatpush1.bf16.msra.mxu0 %v593
          %614 = vmatprep.subr.bf16.mxu0 0
          %615 = vmatpush1.bf16.msra.mxu0 %v594
          %616 = vmatprep.subr.bf16.mxu0 0
          %617 = vmatpush1.bf16.msra.mxu0 %v595
          %618 = vmatprep.subr.bf16.mxu0 0
          %619 = vmatpush1.bf16.msra.mxu0 %v596
          %620 = vmatprep.subr.bf16.mxu0 0
          %621 = vmatpush1.bf16.msra.mxu0 %v597
          %622 = vmatprep.subr.bf16.mxu0 0
          %623 = vmatpush1.bf16.msra.mxu0 0
          %624 = vmatprep.subr.bf16.mxu0 0
          %625 = vmatpush1.bf16.msra.mxu0 0
          %626 = vmatprep.subr.bf16.mxu0 0
          %627 = vmatpush1.bf16.msra.mxu0 0
          %628 = vmatprep.subr.bf16.mxu0 0
          %629 = vmatpush1.bf16.msra.mxu0 0
          %630 = vmatprep.subr.bf16.mxu0 0
          %631 = vmatpush1.bf16.msra.mxu0 0
          %632 = vmatprep.subr.bf16.mxu0 0
          %633 = vmatpush1.bf16.msra.mxu0 0
          %634 = vmatprep.subr.bf16.mxu0 0
          %635 = vmatpush1.bf16.msra.mxu0 0
          %636 = vmatprep.subr.bf16.mxu0 0
          %637 = vmatpush1.bf16.msra.mxu0 0
          %638 = vmatprep.mubr.bf16.mxu0 0
          %639 = vmatmul.mubr.bf16.gmra.mrb[0].mxu0 %v541
          %v640 = vpop.f32.mrb[0].mxu0
          %v641 = vadd.f32 0.0, %v640
          %v642 = vpop.f32.mrb[0].mxu0
          %v643 = vpop.f32.mrb[0].mxu0
          %v644 = vpop.f32.mrb[0].mxu0
          %645 = vdwg.mxu0
          %v646 = vld [vmem:[%s369] sm:$0x1]
          %v647 = vld [vmem:[%s378] sm:$0x1]
          %v648 = vrot.slane %v641, 4
          %v649 = vadd.f32 %v641, %v648
          %v650 = vrot.slane %v649, 2
          %v651 = vadd.f32 %v649, %v650
          %v652 = vrot.slane %v651, 1
          %v653 = vadd.f32 %v651, %v652
          %v654 = vmul.f32 %v653, 0.125
          %v655 = vsub.f32 %v641, %v654
          %v656 = vsel %vm385, 1, 0
          %vm657 = vcmp.eq.s32.totalorder %v656, 1
          %v658 = vsel %vm657, %v655, 0.0
          %v659 = vmul.f32 %v658, %v658
          %v660 = vrot.slane %v659, 4
          %v661 = vadd.f32 %v659, %v660
          %v662 = vrot.slane %v661, 2
          %v663 = vadd.f32 %v661, %v662
          %v664 = vrot.slane %v663, 1
          %v665 = vadd.f32 %v663, %v664
          %v666 = vmul.f32 %v665, 0.125
          %v667 = vadd.f32 %v666, 1e-05
          %v668 = vrsqrt.pop %v667
          %v669 = vmul.f32 %v646, %v668
          %v671 = vlaneseq
          %v672 = vshrl.u32 %v671, 7
          %v673 = vsub.s32 0, %v672
          %v674 = vrot.slane %v669, %v673
          %v676 = vmul.f32 %v655, %v674
          %v678 = vlaneseq
          %v679 = vshrl.u32 %v678, 7
          %v680 = vsub.s32 0, %v679
          %v681 = vrot.slane %v647, %v680
          %v683 = vadd.f32 %v676, %v681
          %v684 = vmax.f32 %v683, 0.0
          %v685 = vsel %vm657, %v684, 0.0
          %686 = vst [vmem:[#allocation2] sm:$0xff] %v685
        $region64: #{place_processor_forward.1} parent=47 // pred_fallthru
          _
        %p687 = scmp.eq.s32.totalorder %s23, 2
        // Predicated region
        $region65: #{place_processor_forward.1} parent=47 // pred_check
          %p688 = pneg %p687
        $region66: #{place_processor_forward.1} parent=47 // pred_check_branch
          %690 = sbr.rel (%p688) target = $region68
        $region67: #{place_processor_forward.1} parent=47 // pred_region
          %v691 = vld [vmem:[#allocation2] sm:$0xff]
          %692 = vst [vmem:[#allocation8] sm:$0xff] %v691
        $region68: #{place_processor_forward.1} parent=47 // pred_fallthru
          _
        // Predicated region
        $region69: #{place_processor_forward.1} parent=47 // pred_check
          %p693 = pneg %p216
        $region70: #{place_processor_forward.1} parent=47 // pred_check_branch
          %695 = sbr.rel (%p693) target = $region72
        $region71: #{place_processor_forward.1} parent=47 // pred_region
          %s697 = ssub.s32 128, 128
          %698 = vsyncadd [#allocation5], %s697
          %s700 = sshll.u32 [#allocation8], 4
          %s701 = int_to_ptr.vmem [resolvable:$true] %s700
          %703 = dma.vmem_to_hbm [thread:$0]  %s701, 128, %s7, [#allocation5]
        $region72: #{place_processor_forward.1} parent=47 // pred_fallthru
          _
        // Predicated region
        $region73: #{place_processor_forward.1} parent=47 // pred_check
          %p704 = pneg %p216
        $region74: #{place_processor_forward.1} parent=47 // pred_check_branch
          %706 = sbr.rel (%p704) target = $region76
        $region75: #{place_processor_forward.1} parent=47 // pred_region
          %707 = dma.done [#allocation5], 128
        $region76: #{place_processor_forward.1} parent=47 // pred_fallthru
          _
      $region48: #{place_processor_forward.1} parent=5 // pred_fallthru
        _
      %p708 = scmp.le.s32.totalorder 2, %s18
      // Predicated region
      $region77: #{place_processor_forward.1} parent=5 // pred_check
        %p709 = pneg %p708
      $region78: #{place_processor_forward.1} parent=5 // pred_check_branch
        %711 = sbr.rel (%p709) target = $region80
      $region79: #{place_processor_forward.1} parent=5 // pred_region
        %s712 = ssub.s32 %s18, 2
      $region80: #{place_processor_forward.1} parent=5 // pred_fallthru
        _
    $region6: #{place_processor_forward.1} parent=1 // loop_footer
      %s22 = sadd.s32 1, %s18
    $region7: #{place_processor_forward.1} parent=1 // loop_footer_branch
      %17 = sbr.rel target = $region3
    $region8: #{place_processor_forward.1} parent=1 // loop_exit
      _
    %713 = vsyncpa [#allocation4], 1
    %s714 = scalar_lea.sflag [#allocation4], 1
    %715 = vsyncpa %s714, 1
    %716 = vsyncpa [#allocation7], 1
    %s717 = scalar_lea.sflag [#allocation7], 1
    %718 = vsyncpa %s717, 1
    %719 = vsyncpa [#allocation5], 1
    %s720 = scalar_lea.sflag [#allocation5], 1
    %721 = vsyncpa %s720, 1

</llo_original>
